<compile_context>
chip_gen: v7x
topology: tpu7x:2x2x1
jax: 0.10.0
libtpu: 0.0.40
codegen_flags: <defaults>
</compile_context>

<pallas_src>
import functools

import jax
import jax.numpy as jnp
from jax import lax
from jax.experimental import pallas as pl
from jax.experimental.pallas import tpu as pltpu

EPS = 1e-5           # PyTorch BatchNorm1d default eps
IN_F, H1, H2 = 10, 16, 8
VMEM_LIMIT = 48 * 1024 * 1024   # fits v7x (64 MiB physical); plenty on v5e/v6e


# --------------------------- stats kernel (2 phases) ---------------------------
def _stats_kernel(x_ref, w1_ref, w2_ref, gb1_ref, stats_ref,
                  s1_sum, s1_sq, s2_sum, s2_sq, *, batch, tile):
    # Grid = (phase, batch_tile); phase is the slow axis.
    # s1_* hold bn1 (sum, sumsq) during phase 0 and are repurposed in place as
    # bn1 (scale, shift) at the start of phase 1.  s2_* hold bn2 (sum, sumsq).
    p = pl.program_id(0)
    bt = pl.program_id(1)
    nb = pl.num_programs(1)
    inv_b = jnp.float32(1.0 / batch)

    # fc1 in feature-major orientation: h1t[f, b] = sum_k w1[f, k] * x_t[k, b]
    # (fc1 bias dropped: absorbed by training-mode BN).
    h1t = jnp.dot(w1_ref[...], x_ref[...],
                  preferred_element_type=jnp.float32)        # (16, tile)

    @pl.when(jnp.logical_and(p == 0, bt == 0))
    def _init():
        s1_sum[...] = jnp.zeros_like(s1_sum)
        s1_sq[...] = jnp.zeros_like(s1_sq)
        s2_sum[...] = jnp.zeros_like(s2_sum)
        s2_sq[...] = jnp.zeros_like(s2_sq)
        stats_ref[...] = jnp.zeros_like(stats_ref)

    @pl.when(p == 0)
    def _bn1_stats():
        # Zero-padded batch columns give h1t == 0 (no bias) -> contribute 0.
        s1_sum[...] += jnp.sum(h1t, axis=1, keepdims=True)
        s1_sq[...] += jnp.sum(h1t * h1t, axis=1, keepdims=True)

    @pl.when(jnp.logical_and(p == 1, bt == 0))
    def _bn1_finalize():
        g1 = gb1_ref[:, 0:1]
        be1 = gb1_ref[:, 1:2]
        mu = s1_sum[...] * inv_b
        var = jnp.maximum(s1_sq[...] * inv_b - mu * mu, 0.0)   # clamp (f32 cancel)
        scale = g1 * lax.rsqrt(var + EPS)
        shift = be1 - mu * scale
        s1_sum[...] = scale                      # repurpose: bn1 scale
        s1_sq[...] = shift                       # repurpose: bn1 shift
        stats_ref[:, 0:1] = scale
        stats_ref[:, 1:2] = shift

    @pl.when(p == 1)
    def _bn2_stats():
        h1r = jnp.maximum(h1t * s1_sum[...] + s1_sq[...], 0.0)       # bn1 + relu
        h2t = jnp.dot(w2_ref[...], h1r,
                      preferred_element_type=jnp.float32)            # (8, tile)
        col = lax.broadcasted_iota(jnp.int32, (1, tile), 1) + bt * tile
        h2m = jnp.where(col < batch, h2t, 0.0)   # mask padded batch columns
        s2_sum[...] += jnp.sum(h2m, axis=1, keepdims=True)
        s2_sq[...] += jnp.sum(h2m * h2m, axis=1, keepdims=True)

    @pl.when(jnp.logical_and(p == 1, bt == nb - 1))
    def _bn2_emit():
        stats_ref[0:H2, 2:3] = s2_sum[...]
        stats_ref[0:H2, 3:4] = s2_sq[...]


# ------------------------------- emit kernel -----------------------------------
def _emit_kernel(x_ref, w1_ref, w2_ref, slab_ref, o_ref):
    slab = slab_ref[...]                                 # (16, 8) packed params
    s1, t1 = slab[:, 0:1], slab[:, 1:2]                  # bn1 scale/shift (16,1)
    s2, t2 = slab[0:H2, 2:3], slab[0:H2, 3:4]            # bn2 scale/shift (8,1)
    w3c, b3 = slab[0:H2, 4:5], slab[0:1, 5:6]            # fc3 weight col / bias

    h1t = jnp.dot(w1_ref[...], x_ref[...],
                  preferred_element_type=jnp.float32)    # (16, tile)
    h1r = jnp.maximum(h1t * s1 + t1, 0.0)
    h2t = jnp.dot(w2_ref[...], h1r,
                  preferred_element_type=jnp.float32)    # (8, tile)
    h2r = jnp.maximum(h2t * s2 + t2, 0.0)
    # fc3 (N=1) as multiply + 8-sublane reduce; result stays lane-dense (1, tb).
    logits = jnp.sum(h2r * w3c, axis=0, keepdims=True) + b3
    o_ref[...] = jax.nn.sigmoid(logits)


# --------------------------------- wrapper --------------------------------------
def ann_forward(x, params, *, tile=32768):
    """x: (B, 10) f32. Weights are in PyTorch (out_features, in_features) layout."""
    w1, b1, g1, be1, w2, b2, g2, be2, w3, b3 = params
    del b1, b2  # absorbed by training-mode BatchNorm (batch statistics)
    B = x.shape[0]
    assert x.shape[1] == IN_F

    if B <= tile:
        tb = max(8, ((B + 7) // 8) * 8)        # single tile, sublane-rounded
    else:
        assert tile % 128 == 0
        tb = tile
    b_pad = ((B + tb - 1) // tb) * tb
    num_bt = b_pad // tb

    # Feature-major (lane-dense) x: one transpose in the wrapper.
    xt = x.T                                           # (IN_F, B)
    if b_pad != B:
        xt = jnp.pad(xt, ((0, 0), (0, b_pad - B)))     # zero cols contribute 0

    # ---- pass 1: batch statistics -> bn1 (scale, shift), bn2 (sum, sumsq) ----
    gb1 = jnp.stack([g1, be1], axis=1)                 # (16, 2)
    stats_kernel = functools.partial(_stats_kernel, batch=B, tile=tb)
    stats = pl.pallas_call(
        stats_kernel,
        out_shape=jax.ShapeDtypeStruct((H1, 4), jnp.float32),
        grid=(2, num_bt),
        in_specs=[
            pl.BlockSpec((IN_F, tb), lambda p, b: (0, b)),   # x tiles (lane-dense)
            pl.BlockSpec((H1, IN_F), lambda p, b: (0, 0)),   # w1 (resident)
            pl.BlockSpec((H2, H1), lambda p, b: (0, 0)),     # w2 (resident)
            pl.BlockSpec((H1, 2), lambda p, b: (0, 0)),      # (g1, be1) slab
        ],
        out_specs=pl.BlockSpec((H1, 4), lambda p, b: (0, 0)),  # resident stats
        scratch_shapes=[
            pltpu.VMEM((H1, 1), jnp.float32), pltpu.VMEM((H1, 1), jnp.float32),
            pltpu.VMEM((H2, 1), jnp.float32), pltpu.VMEM((H2, 1), jnp.float32),
        ],
        compiler_params=pltpu.CompilerParams(
            dimension_semantics=("arbitrary", "arbitrary"),
            vmem_limit_bytes=VMEM_LIMIT,
        ),
        cost_estimate=pl.CostEstimate(
            flops=2 * B * (2 * IN_F * H1 + H1 * H2),
            transcendentals=0,
            bytes_accessed=2 * b_pad * IN_F * 4,
        ),
    )(xt, w1, w2, gb1)

    # ---- finalize bn2 affine in plain JAX (tiny) ----
    scale1 = stats[:, 0]
    shift1 = stats[:, 1]
    mu2 = stats[:H2, 2] / B
    var2 = jnp.maximum(stats[:H2, 3] / B - mu2 * mu2, 0.0)
    scale2 = g2 * lax.rsqrt(var2 + EPS)
    shift2 = be2 - mu2 * scale2

    # Pack all per-feature emit params into one (16, 8) slab.
    slab = jnp.zeros((H1, 8), jnp.float32)
    slab = slab.at[:, 0].set(scale1).at[:, 1].set(shift1)
    slab = slab.at[:H2, 2].set(scale2).at[:H2, 3].set(shift2)
    slab = slab.at[:H2, 4].set(w3.reshape(H2)).at[0, 5].set(b3.reshape(()))

    # ---- pass 2: emit sigmoid outputs (batch axis parallel -> v7x 2 TCs) ----
    out = pl.pallas_call(
        _emit_kernel,
        out_shape=jax.ShapeDtypeStruct((1, b_pad), jnp.float32),
        grid=(num_bt,),
        in_specs=[
            pl.BlockSpec((IN_F, tb), lambda b: (0, b)),
            pl.BlockSpec((H1, IN_F), lambda b: (0, 0)),
            pl.BlockSpec((H2, H1), lambda b: (0, 0)),
            pl.BlockSpec((H1, 8), lambda b: (0, 0)),
        ],
        out_specs=pl.BlockSpec((1, tb), lambda b: (0, b)),
        compiler_params=pltpu.CompilerParams(
            dimension_semantics=("parallel",),
            vmem_limit_bytes=VMEM_LIMIT,
        ),
        cost_estimate=pl.CostEstimate(
            flops=2 * B * (IN_F * H1 + H1 * H2 + H2),
            transcendentals=B,
            bytes_accessed=b_pad * IN_F * 4 + b_pad * 4,
        ),
    )(xt, w1, w2, slab)
    return out[0, :B].reshape(B, 1)


# ----------------------- init (matches the PyTorch module) -----------------------
def _kaiming_uniform(key, out_f, in_f):
    # The module explicitly calls init.kaiming_uniform(w) (a=0), overriding
    # nn.Linear's default: bound = sqrt(6 / fan_in).
    bound = (6.0 / in_f) ** 0.5
    return jax.random.uniform(key, (out_f, in_f), jnp.float32, -bound, bound)


def _linear_bias(key, in_f, out_f):
    # nn.Linear default bias init: U(-1/sqrt(fan_in), 1/sqrt(fan_in)).
    bound = 1.0 / (in_f ** 0.5)
    return jax.random.uniform(key, (out_f,), jnp.float32, -bound, bound)


def init_params(key):
    k = jax.random.split(key, 6)
    w1 = _kaiming_uniform(k[0], H1, IN_F)   # (16, 10)
    b1 = _linear_bias(k[1], IN_F, H1)       # (16,)
    g1 = jnp.ones((H1,), jnp.float32)
    be1 = jnp.zeros((H1,), jnp.float32)
    w2 = _kaiming_uniform(k[2], H2, H1)     # (8, 16)
    b2 = _linear_bias(k[3], H1, H2)         # (8,)
    g2 = jnp.ones((H2,), jnp.float32)
    be2 = jnp.zeros((H2,), jnp.float32)
    w3 = _kaiming_uniform(k[4], 1, H2)      # (1, 8)
    b3 = _linear_bias(k[5], H2, 1)          # (1,)
    return (w1, b1, g1, be1, w2, b2, g2, be2, w3, b3)


def ann_reference(x, params):
    # Pure-JAX reference of the PyTorch forward (training-mode BN, biased var),
    # including the fc1/fc2 biases that the kernel drops (BN cancels them).
    w1, b1, g1, be1, w2, b2, g2, be2, w3, b3 = params

    def bn(h, g, be):
        mu = h.mean(0, keepdims=True)
        var = ((h - mu) ** 2).mean(0, keepdims=True)
        return g * (h - mu) / jnp.sqrt(var + EPS) + be

    h = jnp.maximum(bn(x @ w1.T + b1, g1, be1), 0.0)
    h = jnp.maximum(bn(h @ w2.T + b2, g2, be2), 0.0)
    return jax.nn.sigmoid(h @ w3.T + b3)


if __name__ == "__main__":
    key = jax.random.PRNGKey(0)
    kx, kp, kx2 = jax.random.split(key, 3)
    params = init_params(kp)

    # Small shape consistent with the module: batch=8, in_features=10.
    x = jax.random.normal(kx, (8, IN_F), jnp.float32)
    out = jax.block_until_ready(ann_forward(x, params))
    ref = ann_reference(x, params)
    assert out.shape == (8, 1)
    assert jnp.allclose(out, ref, atol=3e-5, rtol=1e-4)

    # Exercise the multi-tile / masked path (B not a multiple of the tile).
    x2 = jax.random.normal(kx2, (300, IN_F), jnp.float32)
    out2 = jax.block_until_ready(ann_forward(x2, params, tile=128))
    ref2 = ann_reference(x2, params)
    assert out2.shape == (300, 1)
    assert jnp.allclose(out2, ref2, atol=3e-5, rtol=1e-4)

    print("KERNEL_OK")
</pallas_src>

<mosaic_0001>
module attributes {stable_mosaic.version = 11 : i64} {
  func.func @_stats_kernel(%arg0: i32, %arg1: i32, %arg2: memref<10x8xf32, #tpu.memory_space<vmem>>, %arg3: memref<16x10xf32, #tpu.memory_space<vmem>>, %arg4: memref<8x16xf32, #tpu.memory_space<vmem>>, %arg5: memref<16x2xf32, #tpu.memory_space<vmem>>, %arg6: memref<16x4xf32, #tpu.memory_space<vmem>>, %arg7: memref<16x1xf32, #tpu.memory_space<vmem>>, %arg8: memref<16x1xf32, #tpu.memory_space<vmem>>, %arg9: memref<8x1xf32, #tpu.memory_space<vmem>>, %arg10: memref<8x1xf32, #tpu.memory_space<vmem>>) attributes {dimension_semantics = [#tpu.dimension_semantics<arbitrary>, #tpu.dimension_semantics<arbitrary>], iteration_bounds = array<i64: 2, 1>, scalar_prefetch = 0 : i64, scratch_operands = 4 : i64, tpu.core_type = #tpu.core_type<tc>, window_params = [{transform_indices = @transform_0, window_bounds = array<i64: 10, 8>}, {pipeline_mode = #tpu.pipeline_mode<synchronous>, transform_indices = @transform_1, window_bounds = array<i64: 16, 10>}, {pipeline_mode = #tpu.pipeline_mode<synchronous>, transform_indices = @transform_2, window_bounds = array<i64: 8, 16>}, {pipeline_mode = #tpu.pipeline_mode<synchronous>, transform_indices = @transform_3, window_bounds = array<i64: 16, 2>}, {pipeline_mode = #tpu.pipeline_mode<synchronous>, transform_indices = @transform_4, window_bounds = array<i64: 16, 4>}]} {
    %c0 = arith.constant 0 : index
    %c0_0 = arith.constant 0 : index
    %0 = vector.load %arg3[%c0, %c0_0] : memref<16x10xf32, #tpu.memory_space<vmem>>, vector<16x10xf32>
    %c0_1 = arith.constant 0 : index
    %c0_2 = arith.constant 0 : index
    %1 = vector.load %arg2[%c0_1, %c0_2] : memref<10x8xf32, #tpu.memory_space<vmem>>, vector<10x8xf32>
    %cst = arith.constant dense<0.000000e+00> : vector<16x8xf32>
    %2 = tpu.matmul %0, %1, %cst {dimension_numbers = #tpu.dot_dimension_numbers<[1], [0], [0], [1], [0, 0, 1, 1], [], []>} : vector<16x10xf32>, vector<10x8xf32>, vector<16x8xf32> -> vector<16x8xf32>
    %c0_i32 = arith.constant 0 : i32
    %3 = arith.cmpi eq, %arg0, %c0_i32 : i32
    %c0_i32_3 = arith.constant 0 : i32
    %4 = arith.cmpi eq, %arg1, %c0_i32_3 : i32
    %5 = arith.andi %3, %4 : i1
    %6 = arith.extui %5 : i1 to i32
    %c0_i32_4 = arith.constant 0 : i32
    %7 = arith.cmpi ne, %6, %c0_i32_4 : i32
    scf.if %7 {
      %cst_15 = arith.constant 0.000000e+00 : f32
      %24 = vector.broadcast %cst_15 : f32 to vector<16x1xf32>
      %c0_16 = arith.constant 0 : index
      %c0_17 = arith.constant 0 : index
      %25 = vector.load %arg7[%c0_16, %c0_17] : memref<16x1xf32, #tpu.memory_space<vmem>>, vector<16x1xf32>
      tpu.vector_store %arg7[%c0_16, %c0_17], %24 {strides = array<i32>} : memref<16x1xf32, #tpu.memory_space<vmem>>, vector<16x1xf32>,
      %cst_18 = arith.constant 0.000000e+00 : f32
      %26 = vector.broadcast %cst_18 : f32 to vector<16x1xf32>
      %c0_19 = arith.constant 0 : index
      %c0_20 = arith.constant 0 : index
      %27 = vector.load %arg8[%c0_19, %c0_20] : memref<16x1xf32, #tpu.memory_space<vmem>>, vector<16x1xf32>
      tpu.vector_store %arg8[%c0_19, %c0_20], %26 {strides = array<i32>} : memref<16x1xf32, #tpu.memory_space<vmem>>, vector<16x1xf32>,
      %cst_21 = arith.constant 0.000000e+00 : f32
      %28 = vector.broadcast %cst_21 : f32 to vector<8x1xf32>
      %c0_22 = arith.constant 0 : index
      %c0_23 = arith.constant 0 : index
      %29 = vector.load %arg9[%c0_22, %c0_23] : memref<8x1xf32, #tpu.memory_space<vmem>>, vector<8x1xf32>
      tpu.vector_store %arg9[%c0_22, %c0_23], %28 {strides = array<i32>} : memref<8x1xf32, #tpu.memory_space<vmem>>, vector<8x1xf32>,
      %cst_24 = arith.constant 0.000000e+00 : f32
      %30 = vector.broadcast %cst_24 : f32 to vector<8x1xf32>
      %c0_25 = arith.constant 0 : index
      %c0_26 = arith.constant 0 : index
      %31 = vector.load %arg10[%c0_25, %c0_26] : memref<8x1xf32, #tpu.memory_space<vmem>>, vector<8x1xf32>
      tpu.vector_store %arg10[%c0_25, %c0_26], %30 {strides = array<i32>} : memref<8x1xf32, #tpu.memory_space<vmem>>, vector<8x1xf32>,
      %cst_27 = arith.constant 0.000000e+00 : f32
      %32 = vector.broadcast %cst_27 : f32 to vector<16x4xf32>
      %c0_28 = arith.constant 0 : index
      %c0_29 = arith.constant 0 : index
      %33 = vector.load %arg6[%c0_28, %c0_29] : memref<16x4xf32, #tpu.memory_space<vmem>>, vector<16x4xf32>
      tpu.vector_store %arg6[%c0_28, %c0_29], %32 {strides = array<i32>} : memref<16x4xf32, #tpu.memory_space<vmem>>, vector<16x4xf32>,
    } else {
    }
    %c0_i32_5 = arith.constant 0 : i32
    %8 = arith.cmpi eq, %arg0, %c0_i32_5 : i32
    %9 = arith.extui %8 : i1 to i32
    %c0_i32_6 = arith.constant 0 : i32
    %10 = arith.cmpi ne, %9, %c0_i32_6 : i32
    scf.if %10 {
      %c0_15 = arith.constant 0 : index
      %c0_16 = arith.constant 0 : index
      %24 = vector.load %arg7[%c0_15, %c0_16] : memref<16x1xf32, #tpu.memory_space<vmem>>, vector<16x1xf32>
      %cst_17 = arith.constant dense<0.000000e+00> : vector<16xf32>
      %25 = vector.multi_reduction <add>, %2, %cst_17 [1] : vector<16x8xf32> to vector<16xf32>
      %26 = vector.shape_cast %25 : vector<16xf32> to vector<16x1xf32>
      %27 = arith.addf %24, %26 : vector<16x1xf32>
      %c0_18 = arith.constant 0 : index
      %c0_19 = arith.constant 0 : index
      %28 = vector.load %arg7[%c0_18, %c0_19] : memref<16x1xf32, #tpu.memory_space<vmem>>, vector<16x1xf32>
      tpu.vector_store %arg7[%c0_18, %c0_19], %27 {strides = array<i32>} : memref<16x1xf32, #tpu.memory_space<vmem>>, vector<16x1xf32>,
      %c0_20 = arith.constant 0 : index
      %c0_21 = arith.constant 0 : index
      %29 = vector.load %arg8[%c0_20, %c0_21] : memref<16x1xf32, #tpu.memory_space<vmem>>, vector<16x1xf32>
      %30 = arith.mulf %2, %2 : vector<16x8xf32>
      %cst_22 = arith.constant dense<0.000000e+00> : vector<16xf32>
      %31 = vector.multi_reduction <add>, %30, %cst_22 [1] : vector<16x8xf32> to vector<16xf32>
      %32 = vector.shape_cast %31 : vector<16xf32> to vector<16x1xf32>
      %33 = arith.addf %29, %32 : vector<16x1xf32>
      %c0_23 = arith.constant 0 : index
      %c0_24 = arith.constant 0 : index
      %34 = vector.load %arg8[%c0_23, %c0_24] : memref<16x1xf32, #tpu.memory_space<vmem>>, vector<16x1xf32>
      tpu.vector_store %arg8[%c0_23, %c0_24], %33 {strides = array<i32>} : memref<16x1xf32, #tpu.memory_space<vmem>>, vector<16x1xf32>,
    } else {
    }
    %c1_i32 = arith.constant 1 : i32
    %11 = arith.cmpi eq, %arg0, %c1_i32 : i32
    %c0_i32_7 = arith.constant 0 : i32
    %12 = arith.cmpi eq, %arg1, %c0_i32_7 : i32
    %13 = arith.andi %11, %12 : i1
    %14 = arith.extui %13 : i1 to i32
    %cst_8 = arith.constant 1.250000e-01 : f32
    %c0_i32_9 = arith.constant 0 : i32
    %15 = arith.cmpi ne, %14, %c0_i32_9 : i32
    scf.if %15 {
      %c0_15 = arith.constant 0 : index
      %c0_16 = arith.constant 0 : index
      %24 = vector.load %arg5[%c0_15, %c0_16] : memref<16x2xf32, #tpu.memory_space<vmem>>, vector<16x1xf32>
      %c0_17 = arith.constant 0 : index
      %c1 = arith.constant 1 : index
      %25 = vector.load %arg5[%c0_17, %c1] : memref<16x2xf32, #tpu.memory_space<vmem>>, vector<16x1xf32>
      %c0_18 = arith.constant 0 : index
      %c0_19 = arith.constant 0 : index
      %26 = vector.load %arg7[%c0_18, %c0_19] : memref<16x1xf32, #tpu.memory_space<vmem>>, vector<16x1xf32>
      %27 = vector.broadcast %cst_8 : f32 to vector<16x1xf32>
      %28 = arith.mulf %26, %27 : vector<16x1xf32>
      %c0_20 = arith.constant 0 : index
      %c0_21 = arith.constant 0 : index
      %29 = vector.load %arg8[%c0_20, %c0_21] : memref<16x1xf32, #tpu.memory_space<vmem>>, vector<16x1xf32>
      %30 = vector.broadcast %cst_8 : f32 to vector<16x1xf32>
      %31 = arith.mulf %29, %30 : vector<16x1xf32>
      %32 = arith.mulf %28, %28 : vector<16x1xf32>
      %33 = arith.subf %31, %32 : vector<16x1xf32>
      %cst_22 = arith.constant 0.000000e+00 : f32
      %34 = vector.broadcast %cst_22 : f32 to vector<16x1xf32>
      %35 = arith.maximumf %33, %34 : vector<16x1xf32>
      %cst_23 = arith.constant 9.99999974E-6 : f32
      %36 = vector.broadcast %cst_23 : f32 to vector<16x1xf32>
      %37 = arith.addf %35, %36 : vector<16x1xf32>
      %38 = math.rsqrt %37 : vector<16x1xf32>
      %39 = arith.mulf %24, %38 : vector<16x1xf32>
      %40 = arith.mulf %28, %39 : vector<16x1xf32>
      %41 = arith.subf %25, %40 : vector<16x1xf32>
      %c0_24 = arith.constant 0 : index
      %c0_25 = arith.constant 0 : index
      %42 = vector.load %arg7[%c0_24, %c0_25] : memref<16x1xf32, #tpu.memory_space<vmem>>, vector<16x1xf32>
      tpu.vector_store %arg7[%c0_24, %c0_25], %39 {strides = array<i32>} : memref<16x1xf32, #tpu.memory_space<vmem>>, vector<16x1xf32>,
      %c0_26 = arith.constant 0 : index
      %c0_27 = arith.constant 0 : index
      %43 = vector.load %arg8[%c0_26, %c0_27] : memref<16x1xf32, #tpu.memory_space<vmem>>, vector<16x1xf32>
      tpu.vector_store %arg8[%c0_26, %c0_27], %41 {strides = array<i32>} : memref<16x1xf32, #tpu.memory_space<vmem>>, vector<16x1xf32>,
      %c0_28 = arith.constant 0 : index
      %c0_29 = arith.constant 0 : index
      %44 = vector.load %arg6[%c0_28, %c0_29] : memref<16x4xf32, #tpu.memory_space<vmem>>, vector<16x1xf32>
      tpu.vector_store %arg6[%c0_28, %c0_29], %39 {strides = array<i32>} : memref<16x4xf32, #tpu.memory_space<vmem>>, vector<16x1xf32>,
      %c0_30 = arith.constant 0 : index
      %c1_31 = arith.constant 1 : index
      %45 = vector.load %arg6[%c0_30, %c1_31] : memref<16x4xf32, #tpu.memory_space<vmem>>, vector<16x1xf32>
      tpu.vector_store %arg6[%c0_30, %c1_31], %41 {strides = array<i32>} : memref<16x4xf32, #tpu.memory_space<vmem>>, vector<16x1xf32>,
    } else {
    }
    %c1_i32_10 = arith.constant 1 : i32
    %16 = arith.cmpi eq, %arg0, %c1_i32_10 : i32
    %17 = arith.extui %16 : i1 to i32
    %c0_i32_11 = arith.constant 0 : i32
    %18 = arith.cmpi ne, %17, %c0_i32_11 : i32
    scf.if %18 {
      %c0_15 = arith.constant 0 : index
      %c0_16 = arith.constant 0 : index
      %24 = vector.load %arg7[%c0_15, %c0_16] : memref<16x1xf32, #tpu.memory_space<vmem>>, vector<16x1xf32>
      %25 = vector.broadcast %24 : vector<16x1xf32> to vector<16x8xf32>
      %26 = arith.mulf %2, %25 : vector<16x8xf32>
      %c0_17 = arith.constant 0 : index
      %c0_18 = arith.constant 0 : index
      %27 = vector.load %arg8[%c0_17, %c0_18] : memref<16x1xf32, #tpu.memory_space<vmem>>, vector<16x1xf32>
      %28 = vector.broadcast %27 : vector<16x1xf32> to vector<16x8xf32>
      %29 = arith.addf %26, %28 : vector<16x8xf32>
      %cst_19 = arith.constant 0.000000e+00 : f32
      %30 = vector.broadcast %cst_19 : f32 to vector<16x8xf32>
      %31 = arith.maximumf %29, %30 : vector<16x8xf32>
      %c0_20 = arith.constant 0 : index
      %c0_21 = arith.constant 0 : index
      %32 = vector.load %arg4[%c0_20, %c0_21] : memref<8x16xf32, #tpu.memory_space<vmem>>, vector<8x16xf32>
      %cst_22 = arith.constant dense<0.000000e+00> : vector<8x8xf32>
      %33 = tpu.matmul %32, %31, %cst_22 {dimension_numbers = #tpu.dot_dimension_numbers<[1], [0], [0], [1], [0, 0, 1, 1], [], []>} : vector<8x16xf32>, vector<16x8xf32>, vector<8x8xf32> -> vector<8x8xf32>
      %34 = tpu.iota {dimensions = array<i32: 1>} : vector<1x8xi32>
      %c8_i32 = arith.constant 8 : i32
      %35 = arith.muli %arg1, %c8_i32 : i32
      %36 = vector.broadcast %35 : i32 to vector<1x8xi32>
      %37 = arith.addi %34, %36 : vector<1x8xi32>
      %c8_i32_23 = arith.constant 8 : i32
      %38 = vector.broadcast %c8_i32_23 : i32 to vector<1x8xi32>
      %39 = arith.cmpi slt, %37, %38 : vector<1x8xi32>
      %cst_24 = arith.constant 0.000000e+00 : f32
      %40 = vector.shape_cast %39 : vector<1x8xi1> to vector<1x8xi1>
      %41 = vector.broadcast %40 : vector<1x8xi1> to vector<8x8xi1>
      %42 = vector.broadcast %cst_24 : f32 to vector<8x8xf32>
      %43 = arith.select %41, %33, %42 : vector<8x8xi1>, vector<8x8xf32>
      %c0_25 = arith.constant 0 : index
      %c0_26 = arith.constant 0 : index
      %44 = vector.load %arg9[%c0_25, %c0_26] : memref<8x1xf32, #tpu.memory_space<vmem>>, vector<8x1xf32>
      %cst_27 = arith.constant dense<0.000000e+00> : vector<8xf32>
      %45 = vector.multi_reduction <add>, %43, %cst_27 [1] : vector<8x8xf32> to vector<8xf32>
      %46 = vector.shape_cast %45 : vector<8xf32> to vector<8x1xf32>
      %47 = arith.addf %44, %46 : vector<8x1xf32>
      %c0_28 = arith.constant 0 : index
      %c0_29 = arith.constant 0 : index
      %48 = vector.load %arg9[%c0_28, %c0_29] : memref<8x1xf32, #tpu.memory_space<vmem>>, vector<8x1xf32>
      tpu.vector_store %arg9[%c0_28, %c0_29], %47 {strides = array<i32>} : memref<8x1xf32, #tpu.memory_space<vmem>>, vector<8x1xf32>,
      %c0_30 = arith.constant 0 : index
      %c0_31 = arith.constant 0 : index
      %49 = vector.load %arg10[%c0_30, %c0_31] : memref<8x1xf32, #tpu.memory_space<vmem>>, vector<8x1xf32>
      %50 = arith.mulf %43, %43 : vector<8x8xf32>
      %cst_32 = arith.constant dense<0.000000e+00> : vector<8xf32>
      %51 = vector.multi_reduction <add>, %50, %cst_32 [1] : vector<8x8xf32> to vector<8xf32>
      %52 = vector.shape_cast %51 : vector<8xf32> to vector<8x1xf32>
      %53 = arith.addf %49, %52 : vector<8x1xf32>
      %c0_33 = arith.constant 0 : index
      %c0_34 = arith.constant 0 : index
      %54 = vector.load %arg10[%c0_33, %c0_34] : memref<8x1xf32, #tpu.memory_space<vmem>>, vector<8x1xf32>
      tpu.vector_store %arg10[%c0_33, %c0_34], %53 {strides = array<i32>} : memref<8x1xf32, #tpu.memory_space<vmem>>, vector<8x1xf32>,
    } else {
    }
    %c1_i32_12 = arith.constant 1 : i32
    %19 = arith.cmpi eq, %arg0, %c1_i32_12 : i32
    %c0_i32_13 = arith.constant 0 : i32
    %20 = arith.cmpi eq, %arg1, %c0_i32_13 : i32
    %21 = arith.andi %19, %20 : i1
    %22 = arith.extui %21 : i1 to i32
    %c0_i32_14 = arith.constant 0 : i32
    %23 = arith.cmpi ne, %22, %c0_i32_14 : i32
    scf.if %23 {
      %c0_15 = arith.constant 0 : index
      %c0_16 = arith.constant 0 : index
      %24 = vector.load %arg9[%c0_15, %c0_16] : memref<8x1xf32, #tpu.memory_space<vmem>>, vector<8x1xf32>
      %c0_17 = arith.constant 0 : index
      %c2 = arith.constant 2 : index
      %25 = vector.load %arg6[%c0_17, %c2] : memref<16x4xf32, #tpu.memory_space<vmem>>, vector<8x1xf32>
      tpu.vector_store %arg6[%c0_17, %c2], %24 {strides = array<i32>} : memref<16x4xf32, #tpu.memory_space<vmem>>, vector<8x1xf32>,
      %c0_18 = arith.constant 0 : index
      %c0_19 = arith.constant 0 : index
      %26 = vector.load %arg10[%c0_18, %c0_19] : memref<8x1xf32, #tpu.memory_space<vmem>>, vector<8x1xf32>
      %c0_20 = arith.constant 0 : index
      %c3 = arith.constant 3 : index
      %27 = vector.load %arg6[%c0_20, %c3] : memref<16x4xf32, #tpu.memory_space<vmem>>, vector<8x1xf32>
      tpu.vector_store %arg6[%c0_20, %c3], %26 {strides = array<i32>} : memref<16x4xf32, #tpu.memory_space<vmem>>, vector<8x1xf32>,
    } else {
    }
    return
  }
  func.func @transform_0(%arg0: i32, %arg1: i32) -> (i32, i32) {
    %c0_i32 = arith.constant 0 : i32
    %c0_i32_0 = arith.constant 0 : i32
    return %c0_i32, %arg1 : i32, i32
  }
  func.func @transform_1(%arg0: i32, %arg1: i32) -> (i32, i32) {
    %c0_i32 = arith.constant 0 : i32
    %c0_i32_0 = arith.constant 0 : i32
    %c0_i32_1 = arith.constant 0 : i32
    return %c0_i32, %c0_i32_0 : i32, i32
  }
  func.func @transform_2(%arg0: i32, %arg1: i32) -> (i32, i32) {
    %c0_i32 = arith.constant 0 : i32
    %c0_i32_0 = arith.constant 0 : i32
    %c0_i32_1 = arith.constant 0 : i32
    return %c0_i32, %c0_i32_0 : i32, i32
  }
  func.func @transform_3(%arg0: i32, %arg1: i32) -> (i32, i32) {
    %c0_i32 = arith.constant 0 : i32
    %c0_i32_0 = arith.constant 0 : i32
    %c0_i32_1 = arith.constant 0 : i32
    return %c0_i32, %c0_i32_0 : i32, i32
  }
  func.func @transform_4(%arg0: i32, %arg1: i32) -> (i32, i32) {
    %c0_i32 = arith.constant 0 : i32
    %c0_i32_0 = arith.constant 0 : i32
    %c0_i32_1 = arith.constant 0 : i32
    return %c0_i32, %c0_i32_0 : i32, i32
  }
}

</mosaic_0001>

<llo_original>
// kernel: tpu_custom_call.1
$region0: #{tpu_custom_call.1}
  #allocation0 [shape = 'u32[]', space=smem, size = 0x4, offset = 0x4, fixed_abs, tag = 'smem constant byte address 0x4 - core index']
  #allocation1 [shape = 'u32[144,128]{1,0:T(1,128)}', space=vmem, size = 0x12000, scoped, tag = 'internal scratch']
  #allocation2 [shape = 'f32[16,1]{1,0:T(8,128)}', space=vmem, size = 0x2000, scoped, tag = 'scratch operand']
  #allocation3 [shape = 'f32[16,1]{1,0:T(8,128)}', space=vmem, size = 0x2000, scoped, tag = 'scratch operand']
  #allocation4 [shape = 'f32[8,1]{1,0:T(8,128)}', space=vmem, size = 0x1000, scoped, tag = 'scratch operand']
  #allocation5 [shape = 'f32[8,1]{1,0:T(8,128)}', space=vmem, size = 0x1000, scoped, tag = 'scratch operand']
  %s0 = inlined_call_operand.vmem [shape: f32[10,8], index: 0, kind: input, shape index: {}]
  %s1 = inlined_call_operand.vmem [shape: f32[16,10], index: 1, kind: input, shape index: {}]
  %s2 = inlined_call_operand.vmem [shape: f32[8,16], index: 2, kind: input, shape index: {}]
  %s3 = inlined_call_operand.vmem [shape: f32[16,2], index: 3, kind: input, shape index: {}]
  %s4 = inlined_call_operand.vmem [shape: f32[16,4], index: 4, kind: output, shape index: {}]
  %s5 = sld [smem:[#allocation0]]
  $region69: #{tpu_custom_call.1} parent=0
    _
  %s7 = ssub.s32 1, %s5
  %s8 = scalar_select 0, %s7, %s5
  loop: start=0, step=1, limit=4
  $region2: #{tpu_custom_call.1} parent=0 // loop_pre_header
    _
  $region3: #{tpu_custom_call.1} parent=0 // loop_header
    %s10 = sphi 0, %s14
    %p11 = scmp.ge.s32.totalorder %s10, 4
    %s17 = sphi 0, %s29
    %s18 = sphi 0, %s25
    %s19 = sphi 0, %s17
    %s20 = sphi 0, %s18
    %s21 = sphi 0, %s19
    %s22 = sphi 0, %s20
    %s32 = sphi 0, %s34
    %s35 = sphi 0, %s32
    %s36 = sphi 0, %s35
    %s52 = sphi 0, %s36
    %s56 = sphi 0, %s56
    %s58 = sphi 0, %s56
    %s59 = sphi 0, %s58
    %s73 = sphi 0, %s59
    %s77 = sphi 0, %s77
    %s79 = sphi 0, %s77
    %s80 = sphi 0, %s79
    %s94 = sphi 0, %s80
    %s98 = sphi 0, %s98
    %s100 = sphi 0, %s98
    %s101 = sphi 0, %s100
    %s115 = sphi 0, %s101
    %s119 = sphi 0, %s119
    %s121 = sphi 0, %s119
    %s122 = sphi 0, %s121
    %s136 = sphi 0, %s122
  $region4: #{tpu_custom_call.1} parent=0 // loop_header_branch
    %13 = sbr.rel (%p11) target = $region8
  $region5: #{tpu_custom_call.1} parent=0 // loop_body
    %s15 = ssub.s32 %s10, 1
    %s16 = ssub.s32 %s10, 2
    %s23 = sadd.s32 1, %s18
    %p24 = scmp.ge.s32.totalorder %s23, 1
    %s25 = scalar_select %p24, 0, %s23
    %s26 = sadd.s32 1, %s17
    %s27 = scalar_select %p24, %s26, %s17
    %p28 = scmp.ge.s32.totalorder %s27, 2
    %s29 = scalar_select %p28, 0, %s27
    %s30 = ssub.s32 %s18, %s25
    %p31 = scmp.eq.s32.totalorder %s30, 0
    %s33 = sadd.s32 %s32, 1
    %s34 = scalar_select %p31, %s32, %s33
    %p37 = pneg %p31
    %p38 = scmp.eq.s32.totalorder %s10, 1
    %p39 = por %p37, %p38
    %p40 = scmp.ne.s32.totalorder %s32, %s35
    %p41 = scmp.eq.s32.totalorder %s10, 0
    %p42 = por %p40, %p41
    %p43 = scmp.ne.s32.totalorder %s32, %s35
    %p44 = scmp.eq.s32.totalorder %s15, 1
    %p45 = por %p43, %p44
    %p46 = scmp.ne.s32.totalorder %s35, %s36
    %p47 = scmp.eq.s32.totalorder %s15, 0
    %p48 = por %p46, %p47
    %p49 = scmp.ne.s32.totalorder %s35, %s36
    %p50 = scmp.eq.s32.totalorder %s16, 1
    %p51 = por %p49, %p50
    %p53 = scmp.ne.s32.totalorder %s36, %s52
    %p54 = scmp.eq.s32.totalorder %s16, 0
    %p55 = por %p53, %p54
    %s57 = sadd.s32 %s56, 1
    %p60 = scmp.eq.s32.totalorder %s10, 1
    %p61 = scmp.ne.s32.totalorder %s56, %s58
    %p62 = scmp.eq.s32.totalorder %s10, 0
    %p63 = por %p61, %p62
    %p64 = scmp.ne.s32.totalorder %s56, %s58
    %p65 = scmp.eq.s32.totalorder %s15, 1
    %p66 = por %p64, %p65
    %p67 = scmp.ne.s32.totalorder %s58, %s59
    %p68 = scmp.eq.s32.totalorder %s15, 0
    %p69 = por %p67, %p68
    %p70 = scmp.ne.s32.totalorder %s58, %s59
    %p71 = scmp.eq.s32.totalorder %s16, 1
    %p72 = por %p70, %p71
    %p74 = scmp.ne.s32.totalorder %s59, %s73
    %p75 = scmp.eq.s32.totalorder %s16, 0
    %p76 = por %p74, %p75
    %s78 = sadd.s32 %s77, 1
    %p81 = scmp.eq.s32.totalorder %s10, 1
    %p82 = scmp.ne.s32.totalorder %s77, %s79
    %p83 = scmp.eq.s32.totalorder %s10, 0
    %p84 = por %p82, %p83
    %p85 = scmp.ne.s32.totalorder %s77, %s79
    %p86 = scmp.eq.s32.totalorder %s15, 1
    %p87 = por %p85, %p86
    %p88 = scmp.ne.s32.totalorder %s79, %s80
    %p89 = scmp.eq.s32.totalorder %s15, 0
    %p90 = por %p88, %p89
    %p91 = scmp.ne.s32.totalorder %s79, %s80
    %p92 = scmp.eq.s32.totalorder %s16, 1
    %p93 = por %p91, %p92
    %p95 = scmp.ne.s32.totalorder %s80, %s94
    %p96 = scmp.eq.s32.totalorder %s16, 0
    %p97 = por %p95, %p96
    %s99 = sadd.s32 %s98, 1
    %p102 = scmp.eq.s32.totalorder %s10, 1
    %p103 = scmp.ne.s32.totalorder %s98, %s100
    %p104 = scmp.eq.s32.totalorder %s10, 0
    %p105 = por %p103, %p104
    %p106 = scmp.ne.s32.totalorder %s98, %s100
    %p107 = scmp.eq.s32.totalorder %s15, 1
    %p108 = por %p106, %p107
    %p109 = scmp.ne.s32.totalorder %s100, %s101
    %p110 = scmp.eq.s32.totalorder %s15, 0
    %p111 = por %p109, %p110
    %p112 = scmp.ne.s32.totalorder %s100, %s101
    %p113 = scmp.eq.s32.totalorder %s16, 1
    %p114 = por %p112, %p113
    %p116 = scmp.ne.s32.totalorder %s101, %s115
    %p117 = scmp.eq.s32.totalorder %s16, 0
    %p118 = por %p116, %p117
    %s120 = sadd.s32 %s119, 1
    %p123 = scmp.eq.s32.totalorder %s10, 1
    %p124 = scmp.ne.s32.totalorder %s119, %s121
    %p125 = scmp.eq.s32.totalorder %s10, 0
    %p126 = por %p124, %p125
    %p127 = scmp.ne.s32.totalorder %s119, %s121
    %p128 = scmp.eq.s32.totalorder %s15, 1
    %p129 = por %p127, %p128
    %p130 = scmp.ne.s32.totalorder %s121, %s122
    %p131 = scmp.eq.s32.totalorder %s15, 0
    %p132 = por %p130, %p131
    %p133 = scmp.ne.s32.totalorder %s121, %s122
    %p134 = scmp.eq.s32.totalorder %s16, 1
    %p135 = por %p133, %p134
    %p137 = scmp.ne.s32.totalorder %s122, %s136
    %p138 = scmp.eq.s32.totalorder %s16, 0
    %p139 = por %p137, %p138
    %p140 = scmp.le.s32.totalorder 1, %s10
    %p141 = scmp.lt.s32.totalorder %s10, 3
    %p142 = pnand %p140, %p141
    %p143 = pneg %p142
    // Predicated region
    $region9: #{tpu_custom_call.1} parent=5 // pred_check
      _
    $region10: #{tpu_custom_call.1} parent=5 // pred_check_branch
      %145 = sbr.rel (%p142) target = $region12
    $region11: #{tpu_custom_call.1} parent=5 // pred_region
      %s146 = ssub.s32 %s10, 1
      // Predicated region
      $region13: #{tpu_custom_call.1} parent=11 // pred_check
        %p147 = pneg %p48
      $region14: #{tpu_custom_call.1} parent=11 // pred_check_branch
        %149 = sbr.rel (%p147) target = $region16
      $region15: #{tpu_custom_call.1} parent=11 // pred_region
        %p150 = scmp.lt.s32.totalorder %s20, 0
        %s151 = scalar_select %p150, %s20, 0
        %s152 = smul.addr %s151, 8
        %s153 = scalar_lea.vmem %s0, %s152
      $region16: #{tpu_custom_call.1} parent=11 // pred_fallthru
        _
      // Predicated region
      $region17: #{tpu_custom_call.1} parent=11 // pred_check
        %p154 = pneg %p69
      $region18: #{tpu_custom_call.1} parent=11 // pred_check_branch
        %156 = sbr.rel (%p154) target = $region20
      $region19: #{tpu_custom_call.1} parent=11 // pred_region
        _
      $region20: #{tpu_custom_call.1} parent=11 // pred_fallthru
        _
      // Predicated region
      $region21: #{tpu_custom_call.1} parent=11 // pred_check
        %p157 = pneg %p90
      $region22: #{tpu_custom_call.1} parent=11 // pred_check_branch
        %159 = sbr.rel (%p157) target = $region24
      $region23: #{tpu_custom_call.1} parent=11 // pred_region
        _
      $region24: #{tpu_custom_call.1} parent=11 // pred_fallthru
        _
      // Predicated region
      $region25: #{tpu_custom_call.1} parent=11 // pred_check
        %p160 = pneg %p111
      $region26: #{tpu_custom_call.1} parent=11 // pred_check_branch
        %162 = sbr.rel (%p160) target = $region28
      $region27: #{tpu_custom_call.1} parent=11 // pred_region
        _
      $region28: #{tpu_custom_call.1} parent=11 // pred_fallthru
        _
    $region12: #{tpu_custom_call.1} parent=5 // pred_fallthru
      _
    %p163 = scmp.lt.s32.totalorder %s10, 2
    // Predicated region
    $region29: #{tpu_custom_call.1} parent=5 // pred_check
      %p164 = pneg %p163
    $region30: #{tpu_custom_call.1} parent=5 // pred_check_branch
      %166 = sbr.rel (%p164) target = $region32
    $region31: #{tpu_custom_call.1} parent=5 // pred_region
      _
    $region32: #{tpu_custom_call.1} parent=5 // pred_fallthru
      _
    %p167 = scmp.le.s32.totalorder 1, %s10
    %p168 = scmp.lt.s32.totalorder %s10, 3
    %p169 = pnand %p167, %p168
    %p170 = pneg %p169
    // Predicated region
    $region33: #{tpu_custom_call.1} parent=5 // pred_check
      _
    $region34: #{tpu_custom_call.1} parent=5 // pred_check_branch
      %172 = sbr.rel (%p169) target = $region36
    $region35: #{tpu_custom_call.1} parent=5 // pred_region
      %s173 = ssub.s32 %s10, 1
      %p174 = scmp.lt.s32.totalorder %s20, 0
      %s175 = scalar_select %p174, %s20, 0
      %s176 = smul.addr %s175, 8
      %s177 = scalar_lea.vmem %s0, %s176
      %p178 = pneg %p48
      %p179 = pneg %p45
      %p180 = pneg %p69
      %p181 = pneg %p66
      %p182 = pneg %p90
      %p183 = pneg %p87
      %p184 = pneg %p111
      %p185 = pneg %p108
      %p186 = pneg %p132
      %p187 = pneg %p129
      %p188 = scmp.lt.s32.totalorder %s20, 0
      %s189 = scalar_select %p188, %s20, 0
      %s190 = smul.addr %s189, 8
      %s191 = scalar_lea.vmem %s0, %s190
      %v192 = vld [vmem:[%s1] sm:$0xff]
      %v193 = vld [vmem:[%s1 + $0x8] sm:$0xff]
      %v194 = vld [vmem:[%s191] sm:$0xff]
      %v195 = vld [vmem:[%s191 + $0x8] sm:$0x3]
      %vm196 = vcmask 80896
      %v198 = vsel %vm196, %v192, 0
      %v201 = vsel %vm196, %v193, 0
      %vm203 = vcmask 1041408
      %v205 = vsel %vm203, %v195, 0
      %207 = vmatprep.subr.mxu0 0.0
      %208 = vmatpush1.msra.mxu0 %v194
      %209 = vmatprep.subr.mxu0 0.0
      %210 = vmatpush1.msra.mxu0 %v205
      %211 = vmatprep.subr.mxu0 0.0
      %212 = vmatpush1.msra.mxu0 0.0
      %213 = vmatprep.subr.mxu0 0.0
      %214 = vmatpush1.msra.mxu0 0.0
      %215 = vmatprep.subr.mxu0 0.0
      %216 = vmatpush1.msra.mxu0 0.0
      %217 = vmatprep.subr.mxu0 0.0
      %218 = vmatpush1.msra.mxu0 0.0
      %219 = vmatprep.subr.mxu0 0.0
      %220 = vmatpush1.msra.mxu0 0.0
      %221 = vmatprep.subr.mxu0 0.0
      %222 = vmatpush1.msra.mxu0 0.0
      %223 = vmatprep.subr.mxu0 0.0
      %224 = vmatpush1.msra.mxu0 0.0
      %225 = vmatprep.subr.mxu0 0.0
      %226 = vmatpush1.msra.mxu0 0.0
      %227 = vmatprep.subr.mxu0 0.0
      %228 = vmatpush1.msra.mxu0 0.0
      %229 = vmatprep.subr.mxu0 0.0
      %230 = vmatpush1.msra.mxu0 0.0
      %231 = vmatprep.subr.mxu0 0.0
      %232 = vmatpush1.msra.mxu0 0.0
      %233 = vmatprep.subr.mxu0 0.0
      %234 = vmatpush1.msra.mxu0 0.0
      %235 = vmatprep.subr.mxu0 0.0
      %236 = vmatpush1.msra.mxu0 0.0
      %237 = vmatprep.subr.mxu0 0.0
      %238 = vmatpush1.msra.mxu0 0.0
      %239 = vmatprep.subr.mxu0 0.0
      %240 = vmatpush1.msra.mxu0 0.0
      %241 = vmatprep.subr.mxu0 0.0
      %242 = vmatpush1.msra.mxu0 0.0
      %243 = vmatprep.subr.mxu0 0.0
      %244 = vmatpush1.msra.mxu0 0.0
      %245 = vmatprep.subr.mxu0 0.0
      %246 = vmatpush1.msra.mxu0 0.0
      %247 = vmatprep.subr.mxu0 0.0
      %248 = vmatpush1.msra.mxu0 0.0
      %249 = vmatprep.subr.mxu0 0.0
      %250 = vmatpush1.msra.mxu0 0.0
      %251 = vmatprep.subr.mxu0 0.0
      %252 = vmatpush1.msra.mxu0 0.0
      %253 = vmatprep.subr.mxu0 0.0
      %254 = vmatpush1.msra.mxu0 0.0
      %255 = vmatprep.subr.mxu0 0.0
      %256 = vmatpush1.msra.mxu0 0.0
      %257 = vmatprep.subr.mxu0 0.0
      %258 = vmatpush1.msra.mxu0 0.0
      %259 = vmatprep.subr.mxu0 0.0
      %260 = vmatpush1.msra.mxu0 0.0
      %261 = vmatprep.subr.mxu0 0.0
      %262 = vmatpush1.msra.mxu0 0.0
      %263 = vmatprep.subr.mxu0 0.0
      %264 = vmatpush1.msra.mxu0 0.0
      %265 = vmatprep.subr.mxu0 0.0
      %266 = vmatpush1.msra.mxu0 0.0
      %267 = vmatprep.subr.mxu0 0.0
      %268 = vmatpush1.msra.mxu0 0.0
      %269 = vmatprep.subr.mxu0 0.0
      %270 = vmatpush1.msra.mxu0 0.0
      %271 = vmatprep.mubr.f32.mxu0 0.0
      %272 = vmatmul.mubr.f32.gmra.mrb[0].mxu0 %v198
      %v273 = vpop.f32.mrb[0].mxu0
      %v274 = vadd.f32 0.0, %v273
      %v275 = vpop.f32.mrb[0].mxu0
      %276 = vmatprep.mubr.f32.mxu0 0.0
      %277 = vmatmul.mubr.f32.gmra.mrb[0].mxu0 %v201
      %v278 = vpop.f32.mrb[0].mxu0
      %v279 = vadd.f32 0.0, %v278
      %v280 = vpop.f32.mrb[0].mxu0
      %281 = vdwg.mxu0
      %p282 = scmp.eq.s32.totalorder %s19, 0
      %p283 = scmp.eq.s32.totalorder %s20, 0
      %p284 = pnand %p282, %p283
      %p285 = pneg %p284
      // Predicated region
      $region37: #{tpu_custom_call.1} parent=35 // pred_check
        _
      $region38: #{tpu_custom_call.1} parent=35 // pred_check_branch
        %287 = sbr.rel (%p284) target = $region40
      $region39: #{tpu_custom_call.1} parent=35 // pred_region
        %vm288 = vcmask 7168
        %289 = vst.msk [vmem:[#allocation2] sm:$0xff] %vm288, 0.0
        %290 = vst.msk [vmem:[#allocation2 + $0x8] sm:$0xff] %vm288, 0.0
        %291 = vst.msk [vmem:[#allocation3] sm:$0xff] %vm288, 0.0
        %292 = vst.msk [vmem:[#allocation3 + $0x8] sm:$0xff] %vm288, 0.0
        %293 = vst.msk [vmem:[#allocation4] sm:$0xff] %vm288, 0.0
        %294 = vst.msk [vmem:[#allocation5] sm:$0xff] %vm288, 0.0
        %vm295 = vcmask 31744
        %296 = vst.msk [vmem:[%s4] sm:$0xff] %vm295, 0.0
        %297 = vst.msk [vmem:[%s4 + $0x8] sm:$0xff] %vm295, 0.0
      $region40: #{tpu_custom_call.1} parent=35 // pred_fallthru
        _
      // Predicated region
      $region41: #{tpu_custom_call.1} parent=35 // pred_check
        %p298 = pneg %p282
      $region42: #{tpu_custom_call.1} parent=35 // pred_check_branch
        %300 = sbr.rel (%p298) target = $region44
      $region43: #{tpu_custom_call.1} parent=35 // pred_region
        %v301 = vld [vmem:[#allocation2] sm:$0xff]
        %v302 = vld [vmem:[#allocation2 + $0x8] sm:$0xff]
        %vm303 = vcmask 64512
        %v304 = vsel %vm303, %v274, 0.0
        %305 = vadd.xlane.f32.xlu0 %v304
        %v306 = vpop.xlane.xlu0 %305
        %v307 = vsel %vm303, %v279, 0.0
        %308 = vadd.xlane.f32.xlu0 %v307
        %v309 = vpop.xlane.xlu0 %308
        %v310 = vadd.f32 %v301, %v306
        %v311 = vadd.f32 %v302, %v309
        %vm312 = vcmask 7168
        %313 = vst.msk [vmem:[#allocation2] sm:$0xff] %vm312, %v310
        %314 = vst.msk [vmem:[#allocation2 + $0x8] sm:$0xff] %vm312, %v311
        %v315 = vld [vmem:[#allocation3] sm:$0xff]
        %v316 = vld [vmem:[#allocation3 + $0x8] sm:$0xff]
        %v317 = vmul.f32 %v274, %v274
        %v318 = vmul.f32 %v279, %v279
        %v319 = vsel %vm303, %v317, 0.0
        %320 = vadd.xlane.f32.xlu0 %v319
        %v321 = vpop.xlane.xlu0 %320
        %v322 = vsel %vm303, %v318, 0.0
        %323 = vadd.xlane.f32.xlu0 %v322
        %v324 = vpop.xlane.xlu0 %323
        %v325 = vadd.f32 %v315, %v321
        %v326 = vadd.f32 %v316, %v324
        %327 = vst.msk [vmem:[#allocation3] sm:$0xff] %vm312, %v325
        %328 = vst.msk [vmem:[#allocation3 + $0x8] sm:$0xff] %vm312, %v326
      $region44: #{tpu_custom_call.1} parent=35 // pred_fallthru
        _
      %p329 = scmp.eq.s32.totalorder %s19, 1
      %p330 = pnand %p329, %p283
      %p331 = pneg %p330
      // Predicated region
      $region45: #{tpu_custom_call.1} parent=35 // pred_check
        _
      $region46: #{tpu_custom_call.1} parent=35 // pred_check_branch
        %333 = sbr.rel (%p330) target = $region48
      $region47: #{tpu_custom_call.1} parent=35 // pred_region
        %v334 = vld [vmem:[%s3] sm:$0xff]
        %v335 = vld [vmem:[%s3 + $0x8] sm:$0xff]
        %v336 = vld [vmem:[#allocation2] sm:$0xff]
        %v337 = vld [vmem:[#allocation2 + $0x8] sm:$0xff]
        %v338 = vmul.f32 %v336, 0.125
        %v339 = vmul.f32 %v337, 0.125
        %v340 = vld [vmem:[#allocation3] sm:$0xff]
        %v341 = vld [vmem:[#allocation3 + $0x8] sm:$0xff]
        %v342 = vmul.f32 %v340, 0.125
        %v343 = vmul.f32 %v341, 0.125
        %v344 = vmul.f32 %v338, %v338
        %v345 = vmul.f32 %v339, %v339
        %v346 = vsub.f32 %v342, %v344
        %v347 = vsub.f32 %v343, %v345
        %v348 = vmax.f32 %v346, 0.0
        %v349 = vmax.f32 %v347, 0.0
        %v350 = vadd.f32 %v348, 1e-05
        %v351 = vadd.f32 %v349, 1e-05
        %v352 = vrsqrt.pop %v350
        %v353 = vrsqrt.pop %v351
        %v354 = vmul.f32 %v334, %v352
        %v355 = vmul.f32 %v335, %v353
        %v356 = vmul.f32 %v338, %v354
        %v357 = vmul.f32 %v339, %v355
        %360 = vrot.lane.b32.xlu0 %v356, 1
        %v361 = vpop.permute.xlu0 %360
        %362 = vrot.lane.b32.xlu0 %v357, 1
        %v363 = vpop.permute.xlu0 %362
        %v366 = vsub.f32 %v334, %v361
        %v367 = vsub.f32 %v335, %v363
        %vm368 = vcmask 7168
        %369 = vst.msk [vmem:[#allocation2] sm:$0xff] %vm368, %v354
        %370 = vst.msk [vmem:[#allocation2 + $0x8] sm:$0xff] %vm368, %v355
        %373 = vrot.lane.b32.xlu0 %v366, 127
        %v374 = vpop.permute.xlu0 %373
        %375 = vrot.lane.b32.xlu0 %v367, 127
        %v376 = vpop.permute.xlu0 %375
        %379 = vst.msk [vmem:[#allocation3] sm:$0xff] %vm368, %v374
        %380 = vst.msk [vmem:[#allocation3 + $0x8] sm:$0xff] %vm368, %v376
        %381 = vst.msk [vmem:[%s4] sm:$0xff] %vm368, %v354
        %382 = vst.msk [vmem:[%s4 + $0x8] sm:$0xff] %vm368, %v355
        %vm383 = vcmask 15368
        %384 = vst.msk [vmem:[%s4] sm:$0xff] %vm383, %v366
        %385 = vst.msk [vmem:[%s4 + $0x8] sm:$0xff] %vm383, %v367
      $region48: #{tpu_custom_call.1} parent=35 // pred_fallthru
        _
      // Predicated region
      $region49: #{tpu_custom_call.1} parent=35 // pred_check
        %p386 = pneg %p329
      $region50: #{tpu_custom_call.1} parent=35 // pred_check_branch
        %388 = sbr.rel (%p386) target = $region52
      $region51: #{tpu_custom_call.1} parent=35 // pred_region
        %v389 = vld [vmem:[#allocation2] sm:$0xff]
        %v390 = vld [vmem:[#allocation2 + $0x8] sm:$0xff]
        %392 = vset.pattern.permute.xlu0 0
        %393 = vperm.xlu0 %392, %v389
        %v394 = vpop.permute.xlu0 %393
        %397 = vset.pattern.permute.xlu0 0
        %398 = vperm.xlu0 %397, %v390
        %v399 = vpop.permute.xlu0 %398
        %v401 = vmul.f32 %v274, %v394
        %v402 = vmul.f32 %v279, %v399
        %v403 = vld [vmem:[#allocation3] sm:$0xff]
        %v404 = vld [vmem:[#allocation3 + $0x8] sm:$0xff]
        %406 = vset.pattern.permute.xlu0 0
        %407 = vperm.xlu0 %406, %v403
        %v408 = vpop.permute.xlu0 %407
        %411 = vset.pattern.permute.xlu0 0
        %412 = vperm.xlu0 %411, %v404
        %v413 = vpop.permute.xlu0 %412
        %v415 = vadd.f32 %v401, %v408
        %v416 = vadd.f32 %v402, %v413
        %v417 = vmax.f32 %v415, 0.0
        %v418 = vmax.f32 %v416, 0.0
        %v419 = vld [vmem:[%s2] sm:$0xff]
        %vm420 = vcmask 130048
        %v422 = vsel %vm420, %v419, 0
        %424 = vmatprep.subr.mxu0 0.0
        %425 = vmatpush1.msra.mxu0 %v417
        %426 = vmatprep.subr.mxu0 0.0
        %427 = vmatpush1.msra.mxu0 %v418
        %428 = vmatprep.subr.mxu0 0.0
        %429 = vmatpush1.msra.mxu0 0.0
        %430 = vmatprep.subr.mxu0 0.0
        %431 = vmatpush1.msra.mxu0 0.0
        %432 = vmatprep.subr.mxu0 0.0
        %433 = vmatpush1.msra.mxu0 0.0
        %434 = vmatprep.subr.mxu0 0.0
        %435 = vmatpush1.msra.mxu0 0.0
        %436 = vmatprep.subr.mxu0 0.0
        %437 = vmatpush1.msra.mxu0 0.0
        %438 = vmatprep.subr.mxu0 0.0
        %439 = vmatpush1.msra.mxu0 0.0
        %440 = vmatprep.subr.mxu0 0.0
        %441 = vmatpush1.msra.mxu0 0.0
        %442 = vmatprep.subr.mxu0 0.0
        %443 = vmatpush1.msra.mxu0 0.0
        %444 = vmatprep.subr.mxu0 0.0
        %445 = vmatpush1.msra.mxu0 0.0
        %446 = vmatprep.subr.mxu0 0.0
        %447 = vmatpush1.msra.mxu0 0.0
        %448 = vmatprep.subr.mxu0 0.0
        %449 = vmatpush1.msra.mxu0 0.0
        %450 = vmatprep.subr.mxu0 0.0
        %451 = vmatpush1.msra.mxu0 0.0
        %452 = vmatprep.subr.mxu0 0.0
        %453 = vmatpush1.msra.mxu0 0.0
        %454 = vmatprep.subr.mxu0 0.0
        %455 = vmatpush1.msra.mxu0 0.0
        %456 = vmatprep.subr.mxu0 0.0
        %457 = vmatpush1.msra.mxu0 0.0
        %458 = vmatprep.subr.mxu0 0.0
        %459 = vmatpush1.msra.mxu0 0.0
        %460 = vmatprep.subr.mxu0 0.0
        %461 = vmatpush1.msra.mxu0 0.0
        %462 = vmatprep.subr.mxu0 0.0
        %463 = vmatpush1.msra.mxu0 0.0
        %464 = vmatprep.subr.mxu0 0.0
        %465 = vmatpush1.msra.mxu0 0.0
        %466 = vmatprep.subr.mxu0 0.0
        %467 = vmatpush1.msra.mxu0 0.0
        %468 = vmatprep.subr.mxu0 0.0
        %469 = vmatpush1.msra.mxu0 0.0
        %470 = vmatprep.subr.mxu0 0.0
        %471 = vmatpush1.msra.mxu0 0.0
        %472 = vmatprep.subr.mxu0 0.0
        %473 = vmatpush1.msra.mxu0 0.0
        %474 = vmatprep.subr.mxu0 0.0
        %475 = vmatpush1.msra.mxu0 0.0
        %476 = vmatprep.subr.mxu0 0.0
        %477 = vmatpush1.msra.mxu0 0.0
        %478 = vmatprep.subr.mxu0 0.0
        %479 = vmatpush1.msra.mxu0 0.0
        %480 = vmatprep.subr.mxu0 0.0
        %481 = vmatpush1.msra.mxu0 0.0
        %482 = vmatprep.subr.mxu0 0.0
        %483 = vmatpush1.msra.mxu0 0.0
        %484 = vmatprep.subr.mxu0 0.0
        %485 = vmatpush1.msra.mxu0 0.0
        %486 = vmatprep.subr.mxu0 0.0
        %487 = vmatpush1.msra.mxu0 0.0
        %488 = vmatprep.mubr.f32.mxu0 0.0
        %489 = vmatmul.mubr.f32.gmra.mrb[0].mxu0 %v422
        %v490 = vpop.f32.mrb[0].mxu0
        %v491 = vadd.f32 0.0, %v490
        %v492 = vpop.f32.mrb[0].mxu0
        %493 = vdwg.mxu0
        %v494 = vlaneseq
        %v495 = vand.u32 %v494, 127
        %s496 = smul.u32 %s20, 8
        %v497 = vstv %s496
        %v498 = vadd.s32 %v495, %v497
        %vm499 = vcmp.lt.s32.totalorder %v498, 8
        %v500 = vsel %vm499, 1, 0
        %vm501 = vcmp.eq.s32.totalorder %v500, 1
        %v502 = vsel %vm501, %v491, 0.0
        %v503 = vld [vmem:[#allocation4] sm:$0xff]
        %vm504 = vcmask 64512
        %v505 = vsel %vm504, %v502, 0.0
        %506 = vadd.xlane.f32.xlu0 %v505
        %v507 = vpop.xlane.xlu0 %506
        %v508 = vadd.f32 %v503, %v507
        %vm509 = vcmask 7168
        %510 = vst.msk [vmem:[#allocation4] sm:$0xff] %vm509, %v508
        %v511 = vld [vmem:[#allocation5] sm:$0xff]
        %v512 = vmul.f32 %v502, %v502
        %v513 = vsel %vm504, %v512, 0.0
        %514 = vadd.xlane.f32.xlu0 %v513
        %v515 = vpop.xlane.xlu0 %514
        %v516 = vadd.f32 %v511, %v515
        %517 = vst.msk [vmem:[#allocation5] sm:$0xff] %vm509, %v516
      $region52: #{tpu_custom_call.1} parent=35 // pred_fallthru
        _
      // Predicated region
      $region53: #{tpu_custom_call.1} parent=35 // pred_check
        _
      $region54: #{tpu_custom_call.1} parent=35 // pred_check_branch
        %519 = sbr.rel (%p330) target = $region56
      $region55: #{tpu_custom_call.1} parent=35 // pred_region
        %v520 = vld [vmem:[#allocation4] sm:$0xff]
        %522 = vrot.lane.b32.xlu0 %v520, 2
        %v523 = vpop.permute.xlu0 %522
        %vm525 = vcmask 23568
        %526 = vst.msk [vmem:[%s4] sm:$0xff] %vm525, %v523
        %v527 = vld [vmem:[#allocation5] sm:$0xff]
        %529 = vrot.lane.b32.xlu0 %v527, 3
        %v530 = vpop.permute.xlu0 %529
        %vm532 = vcmask 31768
        %533 = vst.msk [vmem:[%s4] sm:$0xff] %vm532, %v530
      $region56: #{tpu_custom_call.1} parent=35 // pred_fallthru
        _
      // Predicated region
      $region57: #{tpu_custom_call.1} parent=35 // pred_check
        %p534 = pneg %p129
      $region58: #{tpu_custom_call.1} parent=35 // pred_check_branch
        %536 = sbr.rel (%p534) target = $region60
      $region59: #{tpu_custom_call.1} parent=35 // pred_region
        _
      $region60: #{tpu_custom_call.1} parent=35 // pred_fallthru
        _
      // Predicated region
      $region61: #{tpu_custom_call.1} parent=35 // pred_check
        %p537 = pneg %p129
      $region62: #{tpu_custom_call.1} parent=35 // pred_check_branch
        %539 = sbr.rel (%p537) target = $region64
      $region63: #{tpu_custom_call.1} parent=35 // pred_region
        _
      $region64: #{tpu_custom_call.1} parent=35 // pred_fallthru
        _
    $region36: #{tpu_custom_call.1} parent=5 // pred_fallthru
      _
    %p540 = scmp.le.s32.totalorder 2, %s10
    // Predicated region
    $region65: #{tpu_custom_call.1} parent=5 // pred_check
      %p541 = pneg %p540
    $region66: #{tpu_custom_call.1} parent=5 // pred_check_branch
      %543 = sbr.rel (%p541) target = $region68
    $region67: #{tpu_custom_call.1} parent=5 // pred_region
      %s544 = ssub.s32 %s10, 2
    $region68: #{tpu_custom_call.1} parent=5 // pred_fallthru
      _
  $region6: #{tpu_custom_call.1} parent=0 // loop_footer
    %s14 = sadd.s32 1, %s10
  $region7: #{tpu_custom_call.1} parent=0 // loop_footer_branch
    %9 = sbr.rel target = $region3
  $region8: #{tpu_custom_call.1} parent=0 // loop_exit
    _

</llo_original>
